<compile_context>
chip_gen: v7x
topology: tpu7x:2x2x1
jax: 0.10.0
libtpu: 0.0.40
codegen_flags: <defaults>
</compile_context>

<pallas_src>
import functools

import jax
import jax.numpy as jnp
from jax.experimental import pallas as pl
from jax.experimental.pallas import tpu as pltpu


def _siamese_kernel(x1_ref, x2_ref, w1_ref, b1_ref, w2r_ref, b2_ref, out_ref,
                    *, apply_softmax):
    """One grid step: TB rows of branch 1 and branch 2.

    x1_ref, x2_ref : (TB, D)  bf16   flattened inputs (one batch tile each)
    w1_ref         : (D, H)   bf16   first linear weight (VMEM-resident)
    b1_ref         : (1, H)   f32    first linear bias
    w2r_ref        : (1, H)   f32    column 0 of the second weight, as a row
    b2_ref         : (1, 1)   f32    bias of the kept logit
    out_ref        : (TB, 2)  f32    stacked logits (or softmax probs)
    """
    tb = out_ref.shape[0]

    # Fuse the two branches: one (2*TB, D) activation -> ONE MXU matmul.
    x = jnp.concatenate([x1_ref[...], x2_ref[...]], axis=0)          # (2TB, D) bf16
    h = jnp.dot(x, w1_ref[...], preferred_element_type=jnp.float32)  # (2TB, H) f32
    h = jnp.maximum(h + b1_ref[...], 0.0)                            # bias + ReLU, f32

    # Second layer, only the kept column: tiny contraction on the VPU/XLU.
    logit = jnp.sum(h * w2r_ref[...], axis=-1, keepdims=True) + b2_ref[...]  # (2TB, 1)

    # torch.stack([o1[..., 0], o2[..., 0]], dim=-1) -> single lane-dense-ish store.
    together = jnp.concatenate([logit[:tb, :], logit[tb:, :]], axis=1)       # (TB, 2)

    if apply_softmax:
        # Fused 2-wide softmax (exp on the EUP; exact reciprocal to keep the
        # result bit-close to jax.nn.softmax).
        m = jnp.max(together, axis=-1, keepdims=True)
        e = jnp.exp(together - m)
        together = e * pl.reciprocal(jnp.sum(e, axis=-1, keepdims=True), approx=False)

    out_ref[...] = together   # one store instead of two masked column writes


def siamese_forward(input1, input2, params, return_logits=True, block_b=256):
    """JAX wrapper. input1/input2 are NCHW tensors; params = (W1, b1, W2, b2)."""
    w1, b1, w2, b2 = params
    batch = input1.shape[0]
    d, hidden = w1.shape

    x1 = input1.reshape(batch, -1)
    x2 = input2.reshape(batch, -1)

    # bf16 on the first-matmul operands (halves the dominant HBM traffic and
    # doubles MXU rate); accumulation and all post-MXU math stay f32.
    x1 = x1.astype(jnp.bfloat16)
    x2 = x2.astype(jnp.bfloat16)
    w1_bf = w1.astype(jnp.bfloat16)
    b1_row = b1.reshape(1, hidden).astype(jnp.float32)
    # Only compute the logit we keep: column 0 of W2 / b2.
    w2_row = w2[:, 0].reshape(1, hidden).astype(jnp.float32)
    b2_0 = b2.reshape(-1)[0].reshape(1, 1).astype(jnp.float32)

    # Batch tile: multiple of 8 sublanes; pad the batch up to a tile multiple.
    # (For v7x re-derive block_b against 64 MiB VMEM if D is very large.)
    tb = min(block_b, max(8, ((batch + 7) // 8) * 8))
    bp = ((batch + tb - 1) // tb) * tb
    if bp != batch:
        pad = ((0, bp - batch), (0, 0))
        x1 = jnp.pad(x1, pad)
        x2 = jnp.pad(x2, pad)

    kernel = functools.partial(_siamese_kernel, apply_softmax=not return_logits)

    cost = pl.CostEstimate(
        flops=2 * (2 * bp) * d * hidden + 4 * bp * hidden,
        transcendentals=0 if return_logits else 2 * bp,
        bytes_accessed=2 * bp * d * 2 + d * hidden * 2 + (2 * hidden + 1) * 4 + bp * 2 * 4,
    )

    out = pl.pallas_call(
        kernel,
        out_shape=jax.ShapeDtypeStruct((bp, 2), jnp.float32),
        grid=(bp // tb,),
        in_specs=[
            pl.BlockSpec((tb, d), lambda i: (i, 0)),      # x1 tile (pipelined)
            pl.BlockSpec((tb, d), lambda i: (i, 0)),      # x2 tile (pipelined)
            pl.BlockSpec((d, hidden), lambda i: (0, 0)),  # W1, resident across grid
            pl.BlockSpec((1, hidden), lambda i: (0, 0)),  # b1
            pl.BlockSpec((1, hidden), lambda i: (0, 0)),  # W2[:, 0] as a row
            pl.BlockSpec((1, 1), lambda i: (0, 0)),       # b2[0]
        ],
        out_specs=pl.BlockSpec((tb, 2), lambda i: (i, 0)),
        compiler_params=pltpu.CompilerParams(
            dimension_semantics=("parallel",),            # lets v7x use both TCs
        ),
        cost_estimate=cost,
    )(x1, x2, w1_bf, b1_row, w2_row, b2_0)

    return out[:batch]


def init_params(key, in_dim, hidden, num_classes):
    k1, k2 = jax.random.split(key)
    w1 = jax.random.normal(k1, (in_dim, hidden), jnp.float32) * 0.02
    b1 = jnp.zeros((1, hidden), jnp.float32)
    w2 = jax.random.normal(k2, (hidden, num_classes), jnp.float32) * 0.02
    b2 = jnp.zeros((1, num_classes), jnp.float32)
    return w1, b1, w2, b2


def _reference_forward(input1, input2, params, return_logits=True, mixed=False):
    """Pure-JAX reference mirroring the PyTorch semantics.

    mixed=True mirrors the kernel's bf16 first-matmul inputs (f32 accumulation)
    for a tight numerical comparison; mixed=False is full f32 (PyTorch-like).
    """
    w1, b1, w2, b2 = params

    def backbone(x):
        x = x.reshape(x.shape[0], -1)
        if mixed:
            h = jnp.dot(x.astype(jnp.bfloat16), w1.astype(jnp.bfloat16),
                        preferred_element_type=jnp.float32)
        else:
            h = x @ w1
        h = jnp.maximum(h + b1, 0.0)
        return h @ w2 + b2

    o1 = backbone(input1)[..., 0]
    o2 = backbone(input2)[..., 0]
    together = jnp.stack([o1, o2], axis=-1)
    if return_logits:
        return together
    return jax.nn.softmax(together, axis=-1)


if __name__ == "__main__":
    B, C, H, W = 2, 4, 16, 16
    HIDDEN, NUM_CLASSES = 32, 2
    D = C * H * W

    key = jax.random.PRNGKey(0)
    k_in1, k_in2, k_par = jax.random.split(key, 3)
    input1 = jax.random.normal(k_in1, (B, C, H, W), jnp.float32)
    input2 = jax.random.normal(k_in2, (B, C, H, W), jnp.float32)
    params = init_params(k_par, D, HIDDEN, NUM_CLASSES)

    logits = siamese_forward(input1, input2, params, return_logits=True)
    probs = siamese_forward(input1, input2, params, return_logits=False)
    jax.block_until_ready(logits)
    jax.block_until_ready(probs)

    assert logits.shape == (B, 2)
    assert probs.shape == (B, 2)

    # Tight check against a reference that mirrors the kernel's bf16 first matmul.
    ref_logits_mx = _reference_forward(input1, input2, params, True, mixed=True)
    ref_probs_mx = _reference_forward(input1, input2, params, False, mixed=True)
    assert jnp.allclose(logits, ref_logits_mx, atol=1e-4, rtol=1e-4)
    assert jnp.allclose(probs, ref_probs_mx, atol=1e-4, rtol=1e-4)

    # Loose check against the full-f32 (PyTorch-equivalent) semantics; the only
    # difference is the intentional bf16 cast of the first-matmul inputs.
    ref_logits = _reference_forward(input1, input2, params, True, mixed=False)
    ref_probs = _reference_forward(input1, input2, params, False, mixed=False)
    assert jnp.allclose(logits, ref_logits, atol=1e-2, rtol=1e-2)
    assert jnp.allclose(probs, ref_probs, atol=1e-2, rtol=1e-2)

    print("KERNEL_OK")
</pallas_src>

<mosaic_0001>
module attributes {stable_mosaic.version = 11 : i64} {
  func.func @_siamese_kernel(%arg0: i32, %arg1: memref<8x1024xbf16, #tpu.memory_space<vmem>>, %arg2: memref<8x1024xbf16, #tpu.memory_space<vmem>>, %arg3: memref<1024x32xbf16, #tpu.memory_space<vmem>>, %arg4: memref<1x32xf32, #tpu.memory_space<vmem>>, %arg5: memref<1x32xf32, #tpu.memory_space<vmem>>, %arg6: memref<1x1xf32, #tpu.memory_space<vmem>>, %arg7: memref<8x2xf32, #tpu.memory_space<vmem>>) attributes {dimension_semantics = [#tpu.dimension_semantics<parallel>], iteration_bounds = array<i64: 1>, scalar_prefetch = 0 : i64, scratch_operands = 0 : i64, tpu.core_type = #tpu.core_type<tc>, window_params = [{transform_indices = @transform_0, window_bounds = array<i64: 8, 1024>}, {transform_indices = @transform_1, window_bounds = array<i64: 8, 1024>}, {pipeline_mode = #tpu.pipeline_mode<synchronous>, transform_indices = @transform_2, window_bounds = array<i64: 1024, 32>}, {pipeline_mode = #tpu.pipeline_mode<synchronous>, transform_indices = @transform_3, window_bounds = array<i64: 1, 32>}, {pipeline_mode = #tpu.pipeline_mode<synchronous>, transform_indices = @transform_4, window_bounds = array<i64: 1, 32>}, {pipeline_mode = #tpu.pipeline_mode<synchronous>, transform_indices = @transform_5, window_bounds = array<i64: 1, 1>}, {transform_indices = @transform_6, window_bounds = array<i64: 8, 2>}]} {
    %c0 = arith.constant 0 : index
    %c0_0 = arith.constant 0 : index
    %0 = vector.load %arg1[%c0, %c0_0] : memref<8x1024xbf16, #tpu.memory_space<vmem>>, vector<8x1024xbf16>
    %c0_1 = arith.constant 0 : index
    %c0_2 = arith.constant 0 : index
    %1 = vector.load %arg2[%c0_1, %c0_2] : memref<8x1024xbf16, #tpu.memory_space<vmem>>, vector<8x1024xbf16>
    %2 = tpu.concatenate %0, %1 in 0 : vector<8x1024xbf16>, vector<8x1024xbf16> -> vector<16x1024xbf16>
    %c0_3 = arith.constant 0 : index
    %c0_4 = arith.constant 0 : index
    %3 = vector.load %arg3[%c0_3, %c0_4] : memref<1024x32xbf16, #tpu.memory_space<vmem>>, vector<1024x32xbf16>
    %cst = arith.constant dense<0.000000e+00> : vector<16x32xf32>
    %4 = tpu.matmul %2, %3, %cst {dimension_numbers = #tpu.dot_dimension_numbers<[1], [0], [0], [1], [0, 0, 1, 1], [], []>} : vector<16x1024xbf16>, vector<1024x32xbf16>, vector<16x32xf32> -> vector<16x32xf32>
    %c0_5 = arith.constant 0 : index
    %c0_6 = arith.constant 0 : index
    %5 = vector.load %arg4[%c0_5, %c0_6] : memref<1x32xf32, #tpu.memory_space<vmem>>, vector<1x32xf32>
    %6 = vector.broadcast %5 : vector<1x32xf32> to vector<16x32xf32>
    %7 = arith.addf %4, %6 : vector<16x32xf32>
    %cst_7 = arith.constant 0.000000e+00 : f32
    %8 = vector.broadcast %cst_7 : f32 to vector<16x32xf32>
    %9 = arith.maximumf %7, %8 : vector<16x32xf32>
    %c0_8 = arith.constant 0 : index
    %c0_9 = arith.constant 0 : index
    %10 = vector.load %arg5[%c0_8, %c0_9] : memref<1x32xf32, #tpu.memory_space<vmem>>, vector<1x32xf32>
    %11 = vector.broadcast %10 : vector<1x32xf32> to vector<16x32xf32>
    %12 = arith.mulf %9, %11 : vector<16x32xf32>
    %cst_10 = arith.constant dense<0.000000e+00> : vector<16xf32>
    %13 = vector.multi_reduction <add>, %12, %cst_10 [1] : vector<16x32xf32> to vector<16xf32>
    %14 = vector.shape_cast %13 : vector<16xf32> to vector<16x1xf32>
    %c0_11 = arith.constant 0 : index
    %c0_12 = arith.constant 0 : index
    %15 = vector.load %arg6[%c0_11, %c0_12] : memref<1x1xf32, #tpu.memory_space<vmem>>, vector<1x1xf32>
    %16 = vector.broadcast %15 : vector<1x1xf32> to vector<16x1xf32>
    %17 = arith.addf %14, %16 : vector<16x1xf32>
    %18 = vector.extract_strided_slice %17 {offsets = [0, 0], sizes = [8, 1], strides = [1, 1]} : vector<16x1xf32> to vector<8x1xf32>
    %19 = vector.extract_strided_slice %17 {offsets = [8, 0], sizes = [8, 1], strides = [1, 1]} : vector<16x1xf32> to vector<8x1xf32>
    %20 = tpu.concatenate %18, %19 in 1 : vector<8x1xf32>, vector<8x1xf32> -> vector<8x2xf32>
    %c0_13 = arith.constant 0 : index
    %c0_14 = arith.constant 0 : index
    %21 = vector.load %arg7[%c0_13, %c0_14] : memref<8x2xf32, #tpu.memory_space<vmem>>, vector<8x2xf32>
    tpu.vector_store %arg7[%c0_13, %c0_14], %20 {strides = array<i32>} : memref<8x2xf32, #tpu.memory_space<vmem>>, vector<8x2xf32>,
    return
  }
  func.func @transform_0(%arg0: i32) -> (i32, i32) {
    %c0_i32 = arith.constant 0 : i32
    %c0_i32_0 = arith.constant 0 : i32
    return %arg0, %c0_i32 : i32, i32
  }
  func.func @transform_1(%arg0: i32) -> (i32, i32) {
    %c0_i32 = arith.constant 0 : i32
    %c0_i32_0 = arith.constant 0 : i32
    return %arg0, %c0_i32 : i32, i32
  }
  func.func @transform_2(%arg0: i32) -> (i32, i32) {
    %c0_i32 = arith.constant 0 : i32
    %c0_i32_0 = arith.constant 0 : i32
    %c0_i32_1 = arith.constant 0 : i32
    return %c0_i32, %c0_i32_0 : i32, i32
  }
  func.func @transform_3(%arg0: i32) -> (i32, i32) {
    %c0_i32 = arith.constant 0 : i32
    %c0_i32_0 = arith.constant 0 : i32
    %c0_i32_1 = arith.constant 0 : i32
    return %c0_i32, %c0_i32_0 : i32, i32
  }
  func.func @transform_4(%arg0: i32) -> (i32, i32) {
    %c0_i32 = arith.constant 0 : i32
    %c0_i32_0 = arith.constant 0 : i32
    %c0_i32_1 = arith.constant 0 : i32
    return %c0_i32, %c0_i32_0 : i32, i32
  }
  func.func @transform_5(%arg0: i32) -> (i32, i32) {
    %c0_i32 = arith.constant 0 : i32
    %c0_i32_0 = arith.constant 0 : i32
    %c0_i32_1 = arith.constant 0 : i32
    return %c0_i32, %c0_i32_0 : i32, i32
  }
  func.func @transform_6(%arg0: i32) -> (i32, i32) {
    %c0_i32 = arith.constant 0 : i32
    %c0_i32_0 = arith.constant 0 : i32
    return %arg0, %c0_i32 : i32, i32
  }
}

</mosaic_0001>

<llo_original>
// kernel: tpu_custom_call.1
$region0: #{tpu_custom_call.1}
  #allocation0 [shape = 'u32[]', space=smem, size = 0x4, offset = 0x4, fixed_abs, tag = 'smem constant byte address 0x4 - core index']
  #allocation1 [shape = 'u32[144,128]{1,0:T(1,128)}', space=vmem, size = 0x12000, scoped, tag = 'internal scratch']
  #allocation2 [shape = 'f32[1,1]{1,0:T(1,128)S(1)}', space=vmem, size = 0x200, scoped, tag = 'scoped memory for tpu_custom_call.1']
  %s0 = inlined_call_operand.vmem [shape: bf16[8,1024], index: 0, kind: input, shape index: {}]
  %s1 = inlined_call_operand.vmem [shape: bf16[8,1024], index: 1, kind: input, shape index: {}]
  %s2 = inlined_call_operand.vmem [shape: bf16[1024,32], index: 2, kind: input, shape index: {}]
  %s3 = inlined_call_operand.vmem [shape: f32[1,32], index: 3, kind: input, shape index: {}]
  %s4 = inlined_call_operand.vmem [shape: f32[1,32], index: 4, kind: input, shape index: {}]
  %s5 = inlined_call_operand.<no memory space> [shape: f32[1,1], index: 5, kind: input, shape index: {}]
  %s6 = inlined_call_operand.vmem [shape: f32[8,2], index: 6, kind: output, shape index: {}]
  %s7 = sld [smem:[#allocation0]]
  $region34: #{tpu_custom_call.1} parent=0
    _
  %s9 = ssub.s32 1, %s7
  %s10 = scalar_select 0, %s9, %s7
  %v11 = vstv %s5
  %12 = vst [vmem:[#allocation2] sm:$0x1] %v11
  // Predicated region
  $region2: #{tpu_custom_call.1} parent=0 // pred_check
    _
  $region3: #{tpu_custom_call.1} parent=0 // pred_check_branch
    %14 = sbr.rel (0) target = $region5
  $region4: #{tpu_custom_call.1} parent=0 // pred_region
    _
  $region5: #{tpu_custom_call.1} parent=0 // pred_fallthru
    _
  // Predicated region
  $region6: #{tpu_custom_call.1} parent=0 // pred_check
    _
  $region7: #{tpu_custom_call.1} parent=0 // pred_check_branch
    %16 = sbr.rel (0) target = $region9
  $region8: #{tpu_custom_call.1} parent=0 // pred_region
    _
  $region9: #{tpu_custom_call.1} parent=0 // pred_fallthru
    _
  // Predicated region
  $region10: #{tpu_custom_call.1} parent=0 // pred_check
    _
  $region11: #{tpu_custom_call.1} parent=0 // pred_check_branch
    %18 = sbr.rel (0) target = $region13
  $region12: #{tpu_custom_call.1} parent=0 // pred_region
    _
  $region13: #{tpu_custom_call.1} parent=0 // pred_fallthru
    _
  // Predicated region
  $region14: #{tpu_custom_call.1} parent=0 // pred_check
    _
  $region15: #{tpu_custom_call.1} parent=0 // pred_check_branch
    %20 = sbr.rel (0) target = $region17
  $region16: #{tpu_custom_call.1} parent=0 // pred_region
    _
  $region17: #{tpu_custom_call.1} parent=0 // pred_fallthru
    _
  // Predicated region
  $region18: #{tpu_custom_call.1} parent=0 // pred_check
    _
  $region19: #{tpu_custom_call.1} parent=0 // pred_check_branch
    %22 = sbr.rel (0) target = $region21
  $region20: #{tpu_custom_call.1} parent=0 // pred_region
    _
  $region21: #{tpu_custom_call.1} parent=0 // pred_fallthru
    _
  // Predicated region
  $region22: #{tpu_custom_call.1} parent=0 // pred_check
    _
  $region23: #{tpu_custom_call.1} parent=0 // pred_check_branch
    %24 = sbr.rel (0) target = $region25
  $region24: #{tpu_custom_call.1} parent=0 // pred_region
    _
  $region25: #{tpu_custom_call.1} parent=0 // pred_fallthru
    _
  %v26 = vld [vmem:[%s0] sm:$0xff]
  %v27 = vld [vmem:[%s0 + $0x8] sm:$0xff]
  %v28 = vld [vmem:[%s0 + $0x10] sm:$0xff]
  %v29 = vld [vmem:[%s0 + $0x18] sm:$0xff]
  %v30 = vld [vmem:[%s1] sm:$0xff]
  %v31 = vld [vmem:[%s1 + $0x8] sm:$0xff]
  %v32 = vld [vmem:[%s1 + $0x10] sm:$0xff]
  %v33 = vld [vmem:[%s1 + $0x18] sm:$0xff]
  %v38 = vunpack.c.l.b16 %v26
  %v39 = vunpack.c.h.b16 %v26
  %v40 = vunpack.c.l.b16 %v27
  %v41 = vunpack.c.h.b16 %v27
  %v42 = vunpack.c.l.b16 %v28
  %v43 = vunpack.c.h.b16 %v28
  %v44 = vunpack.c.l.b16 %v29
  %v45 = vunpack.c.h.b16 %v29
  %v46 = vpack.c.b16 %v38, %v38
  %v47 = vpack.c.b16 %v39, %v39
  %v48 = vpack.c.b16 %v40, %v40
  %v49 = vpack.c.b16 %v41, %v41
  %v50 = vpack.c.b16 %v42, %v42
  %v51 = vpack.c.b16 %v43, %v43
  %v52 = vpack.c.b16 %v44, %v44
  %v53 = vpack.c.b16 %v45, %v45
  %v58 = vunpack.c.l.b16 %v30
  %v59 = vunpack.c.h.b16 %v30
  %v60 = vunpack.c.l.b16 %v31
  %v61 = vunpack.c.h.b16 %v31
  %v62 = vunpack.c.l.b16 %v32
  %v63 = vunpack.c.h.b16 %v32
  %v64 = vunpack.c.l.b16 %v33
  %v65 = vunpack.c.h.b16 %v33
  %v66 = vpack.c.b16 %v58, %v58
  %v67 = vpack.c.b16 %v59, %v59
  %v68 = vpack.c.b16 %v60, %v60
  %v69 = vpack.c.b16 %v61, %v61
  %v70 = vpack.c.b16 %v62, %v62
  %v71 = vpack.c.b16 %v63, %v63
  %v72 = vpack.c.b16 %v64, %v64
  %v73 = vpack.c.b16 %v65, %v65
  %vm74 = vcmask 1043456
  %v77 = vsel %vm74, %v46, %v66
  %v81 = vsel %vm74, %v47, %v67
  %v85 = vsel %vm74, %v48, %v68
  %v89 = vsel %vm74, %v49, %v69
  %v93 = vsel %vm74, %v50, %v70
  %v97 = vsel %vm74, %v51, %v71
  %v101 = vsel %vm74, %v52, %v72
  %v105 = vsel %vm74, %v53, %v73
  %v107 = vld [vmem:[%s2] sm:$0xf]
  %v108 = vld [vmem:[%s2 + $0x4] sm:$0xf]
  %v109 = vld [vmem:[%s2 + $0x8] sm:$0xf]
  %v110 = vld [vmem:[%s2 + $0xc] sm:$0xf]
  %v111 = vld [vmem:[%s2 + $0x10] sm:$0xf]
  %v112 = vld [vmem:[%s2 + $0x14] sm:$0xf]
  %v113 = vld [vmem:[%s2 + $0x18] sm:$0xf]
  %v114 = vld [vmem:[%s2 + $0x1c] sm:$0xf]
  %v115 = vld [vmem:[%s2 + $0x20] sm:$0xf]
  %v116 = vld [vmem:[%s2 + $0x24] sm:$0xf]
  %v117 = vld [vmem:[%s2 + $0x28] sm:$0xf]
  %v118 = vld [vmem:[%s2 + $0x2c] sm:$0xf]
  %v119 = vld [vmem:[%s2 + $0x30] sm:$0xf]
  %v120 = vld [vmem:[%s2 + $0x34] sm:$0xf]
  %v121 = vld [vmem:[%s2 + $0x38] sm:$0xf]
  %v122 = vld [vmem:[%s2 + $0x3c] sm:$0xf]
  %v123 = vld [vmem:[%s2 + $0x40] sm:$0xf]
  %v124 = vld [vmem:[%s2 + $0x44] sm:$0xf]
  %v125 = vld [vmem:[%s2 + $0x48] sm:$0xf]
  %v126 = vld [vmem:[%s2 + $0x4c] sm:$0xf]
  %v127 = vld [vmem:[%s2 + $0x50] sm:$0xf]
  %v128 = vld [vmem:[%s2 + $0x54] sm:$0xf]
  %v129 = vld [vmem:[%s2 + $0x58] sm:$0xf]
  %v130 = vld [vmem:[%s2 + $0x5c] sm:$0xf]
  %v131 = vld [vmem:[%s2 + $0x60] sm:$0xf]
  %v132 = vld [vmem:[%s2 + $0x64] sm:$0xf]
  %v133 = vld [vmem:[%s2 + $0x68] sm:$0xf]
  %v134 = vld [vmem:[%s2 + $0x6c] sm:$0xf]
  %v135 = vld [vmem:[%s2 + $0x70] sm:$0xf]
  %v136 = vld [vmem:[%s2 + $0x74] sm:$0xf]
  %v137 = vld [vmem:[%s2 + $0x78] sm:$0xf]
  %v138 = vld [vmem:[%s2 + $0x7c] sm:$0xf]
  %v139 = vld [vmem:[%s2 + $0x80] sm:$0xf]
  %v140 = vld [vmem:[%s2 + $0x84] sm:$0xf]
  %v141 = vld [vmem:[%s2 + $0x88] sm:$0xf]
  %v142 = vld [vmem:[%s2 + $0x8c] sm:$0xf]
  %v143 = vld [vmem:[%s2 + $0x90] sm:$0xf]
  %v144 = vld [vmem:[%s2 + $0x94] sm:$0xf]
  %v145 = vld [vmem:[%s2 + $0x98] sm:$0xf]
  %v146 = vld [vmem:[%s2 + $0x9c] sm:$0xf]
  %v147 = vld [vmem:[%s2 + $0xa0] sm:$0xf]
  %v148 = vld [vmem:[%s2 + $0xa4] sm:$0xf]
  %v149 = vld [vmem:[%s2 + $0xa8] sm:$0xf]
  %v150 = vld [vmem:[%s2 + $0xac] sm:$0xf]
  %v151 = vld [vmem:[%s2 + $0xb0] sm:$0xf]
  %v152 = vld [vmem:[%s2 + $0xb4] sm:$0xf]
  %v153 = vld [vmem:[%s2 + $0xb8] sm:$0xf]
  %v154 = vld [vmem:[%s2 + $0xbc] sm:$0xf]
  %v155 = vld [vmem:[%s2 + $0xc0] sm:$0xf]
  %v156 = vld [vmem:[%s2 + $0xc4] sm:$0xf]
  %v157 = vld [vmem:[%s2 + $0xc8] sm:$0xf]
  %v158 = vld [vmem:[%s2 + $0xcc] sm:$0xf]
  %v159 = vld [vmem:[%s2 + $0xd0] sm:$0xf]
  %v160 = vld [vmem:[%s2 + $0xd4] sm:$0xf]
  %v161 = vld [vmem:[%s2 + $0xd8] sm:$0xf]
  %v162 = vld [vmem:[%s2 + $0xdc] sm:$0xf]
  %v163 = vld [vmem:[%s2 + $0xe0] sm:$0xf]
  %v164 = vld [vmem:[%s2 + $0xe4] sm:$0xf]
  %v165 = vld [vmem:[%s2 + $0xe8] sm:$0xf]
  %v166 = vld [vmem:[%s2 + $0xec] sm:$0xf]
  %v167 = vld [vmem:[%s2 + $0xf0] sm:$0xf]
  %v168 = vld [vmem:[%s2 + $0xf4] sm:$0xf]
  %v169 = vld [vmem:[%s2 + $0xf8] sm:$0xf]
  %v170 = vld [vmem:[%s2 + $0xfc] sm:$0xf]
  %v171 = vld [vmem:[%s2 + $0x100] sm:$0xf]
  %v172 = vld [vmem:[%s2 + $0x104] sm:$0xf]
  %v173 = vld [vmem:[%s2 + $0x108] sm:$0xf]
  %v174 = vld [vmem:[%s2 + $0x10c] sm:$0xf]
  %v175 = vld [vmem:[%s2 + $0x110] sm:$0xf]
  %v176 = vld [vmem:[%s2 + $0x114] sm:$0xf]
  %v177 = vld [vmem:[%s2 + $0x118] sm:$0xf]
  %v178 = vld [vmem:[%s2 + $0x11c] sm:$0xf]
  %v179 = vld [vmem:[%s2 + $0x120] sm:$0xf]
  %v180 = vld [vmem:[%s2 + $0x124] sm:$0xf]
  %v181 = vld [vmem:[%s2 + $0x128] sm:$0xf]
  %v182 = vld [vmem:[%s2 + $0x12c] sm:$0xf]
  %v183 = vld [vmem:[%s2 + $0x130] sm:$0xf]
  %v184 = vld [vmem:[%s2 + $0x134] sm:$0xf]
  %v185 = vld [vmem:[%s2 + $0x138] sm:$0xf]
  %v186 = vld [vmem:[%s2 + $0x13c] sm:$0xf]
  %v187 = vld [vmem:[%s2 + $0x140] sm:$0xf]
  %v188 = vld [vmem:[%s2 + $0x144] sm:$0xf]
  %v189 = vld [vmem:[%s2 + $0x148] sm:$0xf]
  %v190 = vld [vmem:[%s2 + $0x14c] sm:$0xf]
  %v191 = vld [vmem:[%s2 + $0x150] sm:$0xf]
  %v192 = vld [vmem:[%s2 + $0x154] sm:$0xf]
  %v193 = vld [vmem:[%s2 + $0x158] sm:$0xf]
  %v194 = vld [vmem:[%s2 + $0x15c] sm:$0xf]
  %v195 = vld [vmem:[%s2 + $0x160] sm:$0xf]
  %v196 = vld [vmem:[%s2 + $0x164] sm:$0xf]
  %v197 = vld [vmem:[%s2 + $0x168] sm:$0xf]
  %v198 = vld [vmem:[%s2 + $0x16c] sm:$0xf]
  %v199 = vld [vmem:[%s2 + $0x170] sm:$0xf]
  %v200 = vld [vmem:[%s2 + $0x174] sm:$0xf]
  %v201 = vld [vmem:[%s2 + $0x178] sm:$0xf]
  %v202 = vld [vmem:[%s2 + $0x17c] sm:$0xf]
  %v203 = vld [vmem:[%s2 + $0x180] sm:$0xf]
  %v204 = vld [vmem:[%s2 + $0x184] sm:$0xf]
  %v205 = vld [vmem:[%s2 + $0x188] sm:$0xf]
  %v206 = vld [vmem:[%s2 + $0x18c] sm:$0xf]
  %v207 = vld [vmem:[%s2 + $0x190] sm:$0xf]
  %v208 = vld [vmem:[%s2 + $0x194] sm:$0xf]
  %v209 = vld [vmem:[%s2 + $0x198] sm:$0xf]
  %v210 = vld [vmem:[%s2 + $0x19c] sm:$0xf]
  %v211 = vld [vmem:[%s2 + $0x1a0] sm:$0xf]
  %v212 = vld [vmem:[%s2 + $0x1a4] sm:$0xf]
  %v213 = vld [vmem:[%s2 + $0x1a8] sm:$0xf]
  %v214 = vld [vmem:[%s2 + $0x1ac] sm:$0xf]
  %v215 = vld [vmem:[%s2 + $0x1b0] sm:$0xf]
  %v216 = vld [vmem:[%s2 + $0x1b4] sm:$0xf]
  %v217 = vld [vmem:[%s2 + $0x1b8] sm:$0xf]
  %v218 = vld [vmem:[%s2 + $0x1bc] sm:$0xf]
  %v219 = vld [vmem:[%s2 + $0x1c0] sm:$0xf]
  %v220 = vld [vmem:[%s2 + $0x1c4] sm:$0xf]
  %v221 = vld [vmem:[%s2 + $0x1c8] sm:$0xf]
  %v222 = vld [vmem:[%s2 + $0x1cc] sm:$0xf]
  %v223 = vld [vmem:[%s2 + $0x1d0] sm:$0xf]
  %v224 = vld [vmem:[%s2 + $0x1d4] sm:$0xf]
  %v225 = vld [vmem:[%s2 + $0x1d8] sm:$0xf]
  %v226 = vld [vmem:[%s2 + $0x1dc] sm:$0xf]
  %v227 = vld [vmem:[%s2 + $0x1e0] sm:$0xf]
  %v228 = vld [vmem:[%s2 + $0x1e4] sm:$0xf]
  %v229 = vld [vmem:[%s2 + $0x1e8] sm:$0xf]
  %v230 = vld [vmem:[%s2 + $0x1ec] sm:$0xf]
  %v231 = vld [vmem:[%s2 + $0x1f0] sm:$0xf]
  %v232 = vld [vmem:[%s2 + $0x1f4] sm:$0xf]
  %v233 = vld [vmem:[%s2 + $0x1f8] sm:$0xf]
  %v234 = vld [vmem:[%s2 + $0x1fc] sm:$0xf]
  %v235 = vld [vmem:[%s3] sm:$0x1]
  %v237 = vlaneseq
  %v238 = vshrl.u32 %v237, 7
  %v239 = vsub.s32 0, %v238
  %v240 = vrot.slane %v235, %v239
  %v370 = vunpack.c.l.b16 %v107
  %v371 = vunpack.c.l.b16 %v108
  %v372 = vunpack.c.l.b16 %v109
  %v373 = vunpack.c.l.b16 %v110
  %v374 = vunpack.c.l.b16 %v111
  %v375 = vunpack.c.l.b16 %v112
  %v376 = vunpack.c.l.b16 %v113
  %v377 = vunpack.c.l.b16 %v114
  %v378 = vunpack.c.l.b16 %v115
  %v379 = vunpack.c.l.b16 %v116
  %v380 = vunpack.c.l.b16 %v117
  %v381 = vunpack.c.l.b16 %v118
  %v382 = vunpack.c.l.b16 %v119
  %v383 = vunpack.c.l.b16 %v120
  %v384 = vunpack.c.l.b16 %v121
  %v385 = vunpack.c.l.b16 %v122
  %v386 = vunpack.c.l.b16 %v123
  %v387 = vunpack.c.l.b16 %v124
  %v388 = vunpack.c.l.b16 %v125
  %v389 = vunpack.c.l.b16 %v126
  %v390 = vunpack.c.l.b16 %v127
  %v391 = vunpack.c.l.b16 %v128
  %v392 = vunpack.c.l.b16 %v129
  %v393 = vunpack.c.l.b16 %v130
  %v394 = vunpack.c.l.b16 %v131
  %v395 = vunpack.c.l.b16 %v132
  %v396 = vunpack.c.l.b16 %v133
  %v397 = vunpack.c.l.b16 %v134
  %v398 = vunpack.c.l.b16 %v135
  %v399 = vunpack.c.l.b16 %v136
  %v400 = vunpack.c.l.b16 %v137
  %v401 = vunpack.c.l.b16 %v138
  %v402 = vunpack.c.l.b16 %v139
  %v403 = vunpack.c.l.b16 %v140
  %v404 = vunpack.c.l.b16 %v141
  %v405 = vunpack.c.l.b16 %v142
  %v406 = vunpack.c.l.b16 %v143
  %v407 = vunpack.c.l.b16 %v144
  %v408 = vunpack.c.l.b16 %v145
  %v409 = vunpack.c.l.b16 %v146
  %v410 = vunpack.c.l.b16 %v147
  %v411 = vunpack.c.l.b16 %v148
  %v412 = vunpack.c.l.b16 %v149
  %v413 = vunpack.c.l.b16 %v150
  %v414 = vunpack.c.l.b16 %v151
  %v415 = vunpack.c.l.b16 %v152
  %v416 = vunpack.c.l.b16 %v153
  %v417 = vunpack.c.l.b16 %v154
  %v418 = vunpack.c.l.b16 %v155
  %v419 = vunpack.c.l.b16 %v156
  %v420 = vunpack.c.l.b16 %v157
  %v421 = vunpack.c.l.b16 %v158
  %v422 = vunpack.c.l.b16 %v159
  %v423 = vunpack.c.l.b16 %v160
  %v424 = vunpack.c.l.b16 %v161
  %v425 = vunpack.c.l.b16 %v162
  %v426 = vunpack.c.l.b16 %v163
  %v427 = vunpack.c.l.b16 %v164
  %v428 = vunpack.c.l.b16 %v165
  %v429 = vunpack.c.l.b16 %v166
  %v430 = vunpack.c.l.b16 %v167
  %v431 = vunpack.c.l.b16 %v168
  %v432 = vunpack.c.l.b16 %v169
  %v433 = vunpack.c.l.b16 %v170
  %v434 = vunpack.c.l.b16 %v171
  %v435 = vunpack.c.l.b16 %v172
  %v436 = vunpack.c.l.b16 %v173
  %v437 = vunpack.c.l.b16 %v174
  %v438 = vunpack.c.l.b16 %v175
  %v439 = vunpack.c.l.b16 %v176
  %v440 = vunpack.c.l.b16 %v177
  %v441 = vunpack.c.l.b16 %v178
  %v442 = vunpack.c.l.b16 %v179
  %v443 = vunpack.c.l.b16 %v180
  %v444 = vunpack.c.l.b16 %v181
  %v445 = vunpack.c.l.b16 %v182
  %v446 = vunpack.c.l.b16 %v183
  %v447 = vunpack.c.l.b16 %v184
  %v448 = vunpack.c.l.b16 %v185
  %v449 = vunpack.c.l.b16 %v186
  %v450 = vunpack.c.l.b16 %v187
  %v451 = vunpack.c.l.b16 %v188
  %v452 = vunpack.c.l.b16 %v189
  %v453 = vunpack.c.l.b16 %v190
  %v454 = vunpack.c.l.b16 %v191
  %v455 = vunpack.c.l.b16 %v192
  %v456 = vunpack.c.l.b16 %v193
  %v457 = vunpack.c.l.b16 %v194
  %v458 = vunpack.c.l.b16 %v195
  %v459 = vunpack.c.l.b16 %v196
  %v460 = vunpack.c.l.b16 %v197
  %v461 = vunpack.c.l.b16 %v198
  %v462 = vunpack.c.l.b16 %v199
  %v463 = vunpack.c.l.b16 %v200
  %v464 = vunpack.c.l.b16 %v201
  %v465 = vunpack.c.l.b16 %v202
  %v466 = vunpack.c.l.b16 %v203
  %v467 = vunpack.c.l.b16 %v204
  %v468 = vunpack.c.l.b16 %v205
  %v469 = vunpack.c.l.b16 %v206
  %v470 = vunpack.c.l.b16 %v207
  %v471 = vunpack.c.l.b16 %v208
  %v472 = vunpack.c.l.b16 %v209
  %v473 = vunpack.c.l.b16 %v210
  %v474 = vunpack.c.l.b16 %v211
  %v475 = vunpack.c.l.b16 %v212
  %v476 = vunpack.c.l.b16 %v213
  %v477 = vunpack.c.l.b16 %v214
  %v478 = vunpack.c.l.b16 %v215
  %v479 = vunpack.c.l.b16 %v216
  %v480 = vunpack.c.l.b16 %v217
  %v481 = vunpack.c.l.b16 %v218
  %v482 = vunpack.c.l.b16 %v219
  %v483 = vunpack.c.l.b16 %v220
  %v484 = vunpack.c.l.b16 %v221
  %v485 = vunpack.c.l.b16 %v222
  %v486 = vunpack.c.l.b16 %v223
  %v487 = vunpack.c.l.b16 %v224
  %v488 = vunpack.c.l.b16 %v225
  %v489 = vunpack.c.l.b16 %v226
  %v490 = vunpack.c.l.b16 %v227
  %v491 = vunpack.c.l.b16 %v228
  %v492 = vunpack.c.l.b16 %v229
  %v493 = vunpack.c.l.b16 %v230
  %v494 = vunpack.c.l.b16 %v231
  %v495 = vunpack.c.l.b16 %v232
  %v496 = vunpack.c.l.b16 %v233
  %v497 = vunpack.c.l.b16 %v234
  %v498 = vpack.c.b16 %v371, %v370
  %v499 = vpack.c.b16 %v373, %v372
  %v500 = vpack.c.b16 %v375, %v374
  %v501 = vpack.c.b16 %v377, %v376
  %v502 = vpack.c.b16 %v379, %v378
  %v503 = vpack.c.b16 %v381, %v380
  %v504 = vpack.c.b16 %v383, %v382
  %v505 = vpack.c.b16 %v385, %v384
  %v506 = vpack.c.b16 %v387, %v386
  %v507 = vpack.c.b16 %v389, %v388
  %v508 = vpack.c.b16 %v391, %v390
  %v509 = vpack.c.b16 %v393, %v392
  %v510 = vpack.c.b16 %v395, %v394
  %v511 = vpack.c.b16 %v397, %v396
  %v512 = vpack.c.b16 %v399, %v398
  %v513 = vpack.c.b16 %v401, %v400
  %v514 = vpack.c.b16 %v403, %v402
  %v515 = vpack.c.b16 %v405, %v404
  %v516 = vpack.c.b16 %v407, %v406
  %v517 = vpack.c.b16 %v409, %v408
  %v518 = vpack.c.b16 %v411, %v410
  %v519 = vpack.c.b16 %v413, %v412
  %v520 = vpack.c.b16 %v415, %v414
  %v521 = vpack.c.b16 %v417, %v416
  %v522 = vpack.c.b16 %v419, %v418
  %v523 = vpack.c.b16 %v421, %v420
  %v524 = vpack.c.b16 %v423, %v422
  %v525 = vpack.c.b16 %v425, %v424
  %v526 = vpack.c.b16 %v427, %v426
  %v527 = vpack.c.b16 %v429, %v428
  %v528 = vpack.c.b16 %v431, %v430
  %v529 = vpack.c.b16 %v433, %v432
  %v530 = vpack.c.b16 %v435, %v434
  %v531 = vpack.c.b16 %v437, %v436
  %v532 = vpack.c.b16 %v439, %v438
  %v533 = vpack.c.b16 %v441, %v440
  %v534 = vpack.c.b16 %v443, %v442
  %v535 = vpack.c.b16 %v445, %v444
  %v536 = vpack.c.b16 %v447, %v446
  %v537 = vpack.c.b16 %v449, %v448
  %v538 = vpack.c.b16 %v451, %v450
  %v539 = vpack.c.b16 %v453, %v452
  %v540 = vpack.c.b16 %v455, %v454
  %v541 = vpack.c.b16 %v457, %v456
  %v542 = vpack.c.b16 %v459, %v458
  %v543 = vpack.c.b16 %v461, %v460
  %v544 = vpack.c.b16 %v463, %v462
  %v545 = vpack.c.b16 %v465, %v464
  %v546 = vpack.c.b16 %v467, %v466
  %v547 = vpack.c.b16 %v469, %v468
  %v548 = vpack.c.b16 %v471, %v470
  %v549 = vpack.c.b16 %v473, %v472
  %v550 = vpack.c.b16 %v475, %v474
  %v551 = vpack.c.b16 %v477, %v476
  %v552 = vpack.c.b16 %v479, %v478
  %v553 = vpack.c.b16 %v481, %v480
  %v554 = vpack.c.b16 %v483, %v482
  %v555 = vpack.c.b16 %v485, %v484
  %v556 = vpack.c.b16 %v487, %v486
  %v557 = vpack.c.b16 %v489, %v488
  %v558 = vpack.c.b16 %v491, %v490
  %v559 = vpack.c.b16 %v493, %v492
  %v560 = vpack.c.b16 %v495, %v494
  %v561 = vpack.c.b16 %v497, %v496
  %626 = vmatprep.subr.bf16.mxu0 0
  %627 = vmatpush1.bf16.msra.mxu0 %v498
  %628 = vmatprep.subr.bf16.mxu0 0
  %629 = vmatpush1.bf16.msra.mxu0 %v499
  %630 = vmatprep.subr.bf16.mxu0 0
  %631 = vmatpush1.bf16.msra.mxu0 %v500
  %632 = vmatprep.subr.bf16.mxu0 0
  %633 = vmatpush1.bf16.msra.mxu0 %v501
  %634 = vmatprep.subr.bf16.mxu0 0
  %635 = vmatpush1.bf16.msra.mxu0 %v502
  %636 = vmatprep.subr.bf16.mxu0 0
  %637 = vmatpush1.bf16.msra.mxu0 %v503
  %638 = vmatprep.subr.bf16.mxu0 0
  %639 = vmatpush1.bf16.msra.mxu0 %v504
  %640 = vmatprep.subr.bf16.mxu0 0
  %641 = vmatpush1.bf16.msra.mxu0 %v505
  %642 = vmatprep.subr.bf16.mxu0 0
  %643 = vmatpush1.bf16.msra.mxu0 %v506
  %644 = vmatprep.subr.bf16.mxu0 0
  %645 = vmatpush1.bf16.msra.mxu0 %v507
  %646 = vmatprep.subr.bf16.mxu0 0
  %647 = vmatpush1.bf16.msra.mxu0 %v508
  %648 = vmatprep.subr.bf16.mxu0 0
  %649 = vmatpush1.bf16.msra.mxu0 %v509
  %650 = vmatprep.subr.bf16.mxu0 0
  %651 = vmatpush1.bf16.msra.mxu0 %v510
  %652 = vmatprep.subr.bf16.mxu0 0
  %653 = vmatpush1.bf16.msra.mxu0 %v511
  %654 = vmatprep.subr.bf16.mxu0 0
  %655 = vmatpush1.bf16.msra.mxu0 %v512
  %656 = vmatprep.subr.bf16.mxu0 0
  %657 = vmatpush1.bf16.msra.mxu0 %v513
  %658 = vmatprep.mubr.bf16.mxu0 %v81
  %659 = vmatmul.mubr.bf16.gmra.mrb[0].mxu0 %v77
  %v660 = vpop.f32.mrb[0].mxu0
  %v661 = vadd.f32 %v240, %v660
  %v662 = vpop.f32.mrb[0].mxu0
  %v663 = vpop.f32.mrb[0].mxu0
  %v664 = vadd.f32 %v240, %v663
  %v665 = vpop.f32.mrb[0].mxu0
  %666 = vdwg.mxu0
  %667 = vmatprep.subr.bf16.mxu0 0
  %668 = vmatpush1.bf16.msra.mxu0 %v514
  %669 = vmatprep.subr.bf16.mxu0 0
  %670 = vmatpush1.bf16.msra.mxu0 %v515
  %671 = vmatprep.subr.bf16.mxu0 0
  %672 = vmatpush1.bf16.msra.mxu0 %v516
  %673 = vmatprep.subr.bf16.mxu0 0
  %674 = vmatpush1.bf16.msra.mxu0 %v517
  %675 = vmatprep.subr.bf16.mxu0 0
  %676 = vmatpush1.bf16.msra.mxu0 %v518
  %677 = vmatprep.subr.bf16.mxu0 0
  %678 = vmatpush1.bf16.msra.mxu0 %v519
  %679 = vmatprep.subr.bf16.mxu0 0
  %680 = vmatpush1.bf16.msra.mxu0 %v520
  %681 = vmatprep.subr.bf16.mxu0 0
  %682 = vmatpush1.bf16.msra.mxu0 %v521
  %683 = vmatprep.subr.bf16.mxu0 0
  %684 = vmatpush1.bf16.msra.mxu0 %v522
  %685 = vmatprep.subr.bf16.mxu0 0
  %686 = vmatpush1.bf16.msra.mxu0 %v523
  %687 = vmatprep.subr.bf16.mxu0 0
  %688 = vmatpush1.bf16.msra.mxu0 %v524
  %689 = vmatprep.subr.bf16.mxu0 0
  %690 = vmatpush1.bf16.msra.mxu0 %v525
  %691 = vmatprep.subr.bf16.mxu0 0
  %692 = vmatpush1.bf16.msra.mxu0 %v526
  %693 = vmatprep.subr.bf16.mxu0 0
  %694 = vmatpush1.bf16.msra.mxu0 %v527
  %695 = vmatprep.subr.bf16.mxu0 0
  %696 = vmatpush1.bf16.msra.mxu0 %v528
  %697 = vmatprep.subr.bf16.mxu0 0
  %698 = vmatpush1.bf16.msra.mxu0 %v529
  %699 = vmatprep.mubr.bf16.mxu0 %v89
  %700 = vmatmul.mubr.bf16.gmra.mrb[0].mxu0 %v85
  %v701 = vpop.f32.mrb[0].mxu0
  %v702 = vadd.f32 %v661, %v701
  %v703 = vpop.f32.mrb[0].mxu0
  %v704 = vpop.f32.mrb[0].mxu0
  %v705 = vadd.f32 %v664, %v704
  %v706 = vpop.f32.mrb[0].mxu0
  %707 = vdwg.mxu0
  %708 = vmatprep.subr.bf16.mxu0 0
  %709 = vmatpush1.bf16.msra.mxu0 %v530
  %710 = vmatprep.subr.bf16.mxu0 0
  %711 = vmatpush1.bf16.msra.mxu0 %v531
  %712 = vmatprep.subr.bf16.mxu0 0
  %713 = vmatpush1.bf16.msra.mxu0 %v532
  %714 = vmatprep.subr.bf16.mxu0 0
  %715 = vmatpush1.bf16.msra.mxu0 %v533
  %716 = vmatprep.subr.bf16.mxu0 0
  %717 = vmatpush1.bf16.msra.mxu0 %v534
  %718 = vmatprep.subr.bf16.mxu0 0
  %719 = vmatpush1.bf16.msra.mxu0 %v535
  %720 = vmatprep.subr.bf16.mxu0 0
  %721 = vmatpush1.bf16.msra.mxu0 %v536
  %722 = vmatprep.subr.bf16.mxu0 0
  %723 = vmatpush1.bf16.msra.mxu0 %v537
  %724 = vmatprep.subr.bf16.mxu0 0
  %725 = vmatpush1.bf16.msra.mxu0 %v538
  %726 = vmatprep.subr.bf16.mxu0 0
  %727 = vmatpush1.bf16.msra.mxu0 %v539
  %728 = vmatprep.subr.bf16.mxu0 0
  %729 = vmatpush1.bf16.msra.mxu0 %v540
  %730 = vmatprep.subr.bf16.mxu0 0
  %731 = vmatpush1.bf16.msra.mxu0 %v541
  %732 = vmatprep.subr.bf16.mxu0 0
  %733 = vmatpush1.bf16.msra.mxu0 %v542
  %734 = vmatprep.subr.bf16.mxu0 0
  %735 = vmatpush1.bf16.msra.mxu0 %v543
  %736 = vmatprep.subr.bf16.mxu0 0
  %737 = vmatpush1.bf16.msra.mxu0 %v544
  %738 = vmatprep.subr.bf16.mxu0 0
  %739 = vmatpush1.bf16.msra.mxu0 %v545
  %740 = vmatprep.mubr.bf16.mxu0 %v97
  %741 = vmatmul.mubr.bf16.gmra.mrb[0].mxu0 %v93
  %v742 = vpop.f32.mrb[0].mxu0
  %v743 = vadd.f32 %v702, %v742
  %v744 = vpop.f32.mrb[0].mxu0
  %v745 = vpop.f32.mrb[0].mxu0
  %v746 = vadd.f32 %v705, %v745
  %v747 = vpop.f32.mrb[0].mxu0
  %748 = vdwg.mxu0
  %749 = vmatprep.subr.bf16.mxu0 0
  %750 = vmatpush1.bf16.msra.mxu0 %v546
  %751 = vmatprep.subr.bf16.mxu0 0
  %752 = vmatpush1.bf16.msra.mxu0 %v547
  %753 = vmatprep.subr.bf16.mxu0 0
  %754 = vmatpush1.bf16.msra.mxu0 %v548
  %755 = vmatprep.subr.bf16.mxu0 0
  %756 = vmatpush1.bf16.msra.mxu0 %v549
  %757 = vmatprep.subr.bf16.mxu0 0
  %758 = vmatpush1.bf16.msra.mxu0 %v550
  %759 = vmatprep.subr.bf16.mxu0 0
  %760 = vmatpush1.bf16.msra.mxu0 %v551
  %761 = vmatprep.subr.bf16.mxu0 0
  %762 = vmatpush1.bf16.msra.mxu0 %v552
  %763 = vmatprep.subr.bf16.mxu0 0
  %764 = vmatpush1.bf16.msra.mxu0 %v553
  %765 = vmatprep.subr.bf16.mxu0 0
  %766 = vmatpush1.bf16.msra.mxu0 %v554
  %767 = vmatprep.subr.bf16.mxu0 0
  %768 = vmatpush1.bf16.msra.mxu0 %v555
  %769 = vmatprep.subr.bf16.mxu0 0
  %770 = vmatpush1.bf16.msra.mxu0 %v556
  %771 = vmatprep.subr.bf16.mxu0 0
  %772 = vmatpush1.bf16.msra.mxu0 %v557
  %773 = vmatprep.subr.bf16.mxu0 0
  %774 = vmatpush1.bf16.msra.mxu0 %v558
  %775 = vmatprep.subr.bf16.mxu0 0
  %776 = vmatpush1.bf16.msra.mxu0 %v559
  %777 = vmatprep.subr.bf16.mxu0 0
  %778 = vmatpush1.bf16.msra.mxu0 %v560
  %779 = vmatprep.subr.bf16.mxu0 0
  %780 = vmatpush1.bf16.msra.mxu0 %v561
  %781 = vmatprep.mubr.bf16.mxu0 %v105
  %782 = vmatmul.mubr.bf16.gmra.mrb[0].mxu0 %v101
  %v783 = vpop.f32.mrb[0].mxu0
  %v784 = vadd.f32 %v743, %v783
  %v785 = vpop.f32.mrb[0].mxu0
  %v786 = vpop.f32.mrb[0].mxu0
  %v787 = vadd.f32 %v746, %v786
  %v788 = vpop.f32.mrb[0].mxu0
  %789 = vdwg.mxu0
  %v790 = vmax.f32 %v784, 0.0
  %v791 = vmax.f32 %v787, 0.0
  %v792 = vld [vmem:[%s4] sm:$0x1]
  %v794 = vlaneseq
  %v795 = vshrl.u32 %v794, 7
  %v796 = vsub.s32 0, %v795
  %v797 = vrot.slane %v792, %v796
  %v799 = vmul.f32 %v790, %v797
  %v800 = vmul.f32 %v791, %v797
  %vm801 = vcmask 261120
  %v802 = vsel %vm801, %v799, 0.0
  %803 = vadd.xlane.f32.xlu0 %v802
  %v804 = vpop.xlane.xlu0 %803
  %v805 = vsel %vm801, %v800, 0.0
  %806 = vadd.xlane.f32.xlu0 %v805
  %v807 = vpop.xlane.xlu0 %806
  %v808 = vld [vmem:[#allocation2] sm:$0x1]
  %v810 = vlaneseq
  %v811 = vshrl.u32 %v810, 7
  %v812 = vsub.s32 0, %v811
  %v813 = vrot.slane %v808, %v812
  %v815 = vadd.f32 %v804, %v813
  %v816 = vadd.f32 %v807, %v813
  %818 = vrot.lane.b32.xlu0 %v816, 1
  %v819 = vpop.permute.xlu0 %818
  %vm821 = vcmask 7168
  %v822 = vsel %vm821, %v815, %v819
  %vm823 = vcmask 15360
  %824 = vst.msk [vmem:[%s6] sm:$0xff] %vm823, %v822
  // Predicated region
  $region26: #{tpu_custom_call.1} parent=0 // pred_check
    _
  $region27: #{tpu_custom_call.1} parent=0 // pred_check_branch
    %826 = sbr.rel (0) target = $region29
  $region28: #{tpu_custom_call.1} parent=0 // pred_region
    _
  $region29: #{tpu_custom_call.1} parent=0 // pred_fallthru
    _
  // Predicated region
  $region30: #{tpu_custom_call.1} parent=0 // pred_check
    _
  $region31: #{tpu_custom_call.1} parent=0 // pred_check_branch
    %828 = sbr.rel (0) target = $region33
  $region32: #{tpu_custom_call.1} parent=0 // pred_region
    _
  $region33: #{tpu_custom_call.1} parent=0 // pred_fallthru
    _

</llo_original>
